<compile_context>
chip_gen: v5e
topology: v5e:2x2
jax: 0.10.0
libtpu: 0.0.40
codegen_flags: <defaults>
</compile_context>

<pallas_src>
import functools

import jax
import jax.numpy as jnp
from jax import lax
from jax.experimental import pallas as pl
from jax.experimental.pallas import tpu as pltpu


# ----------------------------------------------------------------------------
# Fused Pallas kernel: whole TCN stack on one vertex tile
# ----------------------------------------------------------------------------
def _tcn_fused_kernel(*refs, n_layers, acts):
    """refs = (x_ref, w_0, b_0, w_1, b_1, ..., o_ref)

    x_ref : (C_in0 * T, N_tile)   input slab, vertices on lanes
    w_l   : (C_out_l * T, C_in_l * T)  Toeplitz conv matrix (causal + dilated)
    b_l   : (C_out_l * T, 1)      bias broadcast over lanes
    o_ref : (C_outL * T, N_tile)  output slab
    """
    x_ref = refs[0]
    o_ref = refs[-1]

    h = x_ref[...].astype(jnp.float32)
    for l in range(n_layers):            # small static layer count -> unroll
        w = refs[1 + 2 * l][...]
        b = refs[2 + 2 * l][...]
        h = jnp.dot(w, h, preferred_element_type=jnp.float32) + b
        act = acts[l]
        if act == "relu":
            h = jnp.maximum(h, 0.0)
        elif act == "tanh":
            h = jnp.tanh(h)
        # "identity": nothing to do
    o_ref[...] = h.astype(o_ref.dtype)


# ----------------------------------------------------------------------------
# Host-side helpers
# ----------------------------------------------------------------------------
def _toeplitz_conv_matrix(w, T, dilation):
    """Fold a causal dilated Conv1d (left pad (K-1)*d) over T steps into a
    dense (C_out*T, C_in*T) matrix: y_flat = W @ x_flat (flatten order c*T+t)."""
    C_out, C_in, K = w.shape
    t = jnp.arange(T)[:, None]
    s = jnp.arange(T)[None, :]
    W = jnp.zeros((C_out, T, C_in, T), w.dtype)
    for k in range(K):
        shift = (K - 1 - k) * dilation
        mask = (s == (t - shift)).astype(w.dtype)          # (T, T)
        W = W + w[:, None, :, None, k] * mask[None, :, None, :]
    return W.reshape(C_out * T, C_in * T)


def tcn_forward(x_tnf, params, dilations, activations, *, lane_tile=512):
    """x_tnf: (time, n_vertices, features) time-series tensor."""
    T, N, F = x_tnf.shape

    # (T, N, F) -> (F, T, N) -> (F*T, N): vertices land on the lane axis.
    x_slab = jnp.transpose(x_tnf, (2, 0, 1)).reshape(F * T, N)

    # Pad the vertex axis to a lane-dense multiple of the tile.
    n_tiles = pl.cdiv(N, lane_tile)
    n_pad = n_tiles * lane_tile
    if n_pad != N:
        x_slab = jnp.pad(x_slab, ((0, 0), (0, n_pad - N)))

    # Fold each dilated causal conv (+ bias layout) into dense operands.
    mats, biases = [], []
    for (w, b), d in zip(params, dilations):
        C_out = w.shape[0]
        mats.append(_toeplitz_conv_matrix(w, T, d))
        biases.append(jnp.repeat(b.reshape(C_out), T).reshape(C_out * T, 1))
    C_last = params[-1][0].shape[0]

    kernel = functools.partial(
        _tcn_fused_kernel, n_layers=len(params), acts=tuple(activations)
    )

    operands = [x_slab]
    wb_specs = []
    for W, bb in zip(mats, biases):
        # Constant index maps: weights/bias DMA'd once, stay resident in VMEM.
        wb_specs.append(pl.BlockSpec(W.shape, lambda i: (0, 0)))
        wb_specs.append(pl.BlockSpec(bb.shape, lambda i: (0, 0)))
        operands += [W, bb]

    flops = int(2 * sum(W.shape[0] * W.shape[1] for W in mats) * n_pad)
    transcendentals = int(
        sum(W.shape[0] * n_pad for W, a in zip(mats, activations) if a == "tanh")
    )
    bytes_accessed = int(
        4 * (x_slab.size + C_last * T * n_pad
             + sum(W.size for W in mats) + sum(bb.size for bb in biases))
    )

    out_slab = pl.pallas_call(
        kernel,
        out_shape=jax.ShapeDtypeStruct((C_last * T, n_pad), x_tnf.dtype),
        grid=(n_tiles,),
        in_specs=[pl.BlockSpec((F * T, lane_tile), lambda i: (0, i))] + wb_specs,
        out_specs=pl.BlockSpec((C_last * T, lane_tile), lambda i: (0, i)),
        compiler_params=pltpu.CompilerParams(
            dimension_semantics=("parallel",),
        ),
        cost_estimate=pl.CostEstimate(
            flops=flops,
            transcendentals=transcendentals,
            bytes_accessed=bytes_accessed,
        ),
    )(*operands)

    # (C_out*T, N) -> (C_out, T, N) -> (T, N, C_out)
    out = out_slab[:, :N].reshape(C_last, T, N)
    return jnp.transpose(out, (1, 2, 0))


# ----------------------------------------------------------------------------
# Pure-JAX reference for correctness checking
# ----------------------------------------------------------------------------
def _ref_conv1d(x_nct, w, b, *, dilation, act):
    B, C_in, T = x_nct.shape
    C_out, _, K = w.shape
    pad = (K - 1) * dilation
    xp = jnp.pad(x_nct, ((0, 0), (0, 0), (pad, 0)))        # causal left pad
    out = jnp.zeros((B, C_out, T), jnp.float32)
    for k in range(K):
        xk = xp[:, :, k * dilation: k * dilation + T]
        out = out + jnp.einsum(
            "oc,bct->bot", w[:, :, k], xk, precision=lax.Precision.HIGHEST
        )
    out = out + b.reshape(1, C_out, 1)
    if act == "relu":
        out = jnp.maximum(out, 0.0)
    elif act == "tanh":
        out = jnp.tanh(out)
    return out


def ref_forward(x_tnf, params, dilations, activations):
    h = jnp.transpose(x_tnf, (1, 2, 0))                    # (N, F, T)
    for (w, b), d, act in zip(params, dilations, activations):
        h = _ref_conv1d(h, w, b, dilation=d, act=act)
    return jnp.transpose(h, (2, 0, 1))                     # (T, N, F_out)


# ----------------------------------------------------------------------------
if __name__ == "__main__":
    # TCN config: nodes, kernel_sizes, dilations, activations, bias.
    nodes = [4, 8, 8]
    kernel_sizes = [3, 3]
    dilations = [1, 2]
    activations = ["relu", "relu"]

    # Deterministic parameter init (Conv1d-shaped: (C_out, C_in, K)).
    key = jax.random.PRNGKey(0)
    params = []
    for c_in, c_out, k in zip(nodes[:-1], nodes[1:], kernel_sizes):
        key, kw, kb = jax.random.split(key, 3)
        bound = 1.0 / (c_in * k) ** 0.5
        w = jax.random.uniform(kw, (c_out, c_in, k), jnp.float32, -bound, bound)
        b = jax.random.uniform(kb, (c_out,), jnp.float32, -bound, bound)
        params.append((w, b))

    # Time-series input: (time=8, n_vertices=2048, features=nodes[0]).
    key, kx = jax.random.split(key)
    x = jax.random.normal(kx, (8, 2048, nodes[0]), jnp.float32)

    out = tcn_forward(x, params, dilations, activations, lane_tile=512)
    out = jax.block_until_ready(out)

    ref = ref_forward(x, params, dilations, activations)
    assert out.shape == (8, 2048, nodes[-1]), out.shape
    assert jnp.allclose(out, ref, atol=1e-4, rtol=1e-4), "mismatch vs reference"

    print("KERNEL_OK")
</pallas_src>

<mosaic_0001>
module attributes {stable_mosaic.version = 11 : i64} {
  func.func @_tcn_fused_kernel(%arg0: i32, %arg1: memref<32x512xf32, #tpu.memory_space<vmem>>, %arg2: memref<64x32xf32, #tpu.memory_space<vmem>>, %arg3: memref<64x1xf32, #tpu.memory_space<vmem>>, %arg4: memref<64x64xf32, #tpu.memory_space<vmem>>, %arg5: memref<64x1xf32, #tpu.memory_space<vmem>>, %arg6: memref<64x512xf32, #tpu.memory_space<vmem>>) attributes {dimension_semantics = [#tpu.dimension_semantics<parallel>], iteration_bounds = array<i64: 4>, scalar_prefetch = 0 : i64, scratch_operands = 0 : i64, tpu.core_type = #tpu.core_type<tc>, window_params = [{transform_indices = @transform_0, window_bounds = array<i64: 32, 512>}, {pipeline_mode = #tpu.pipeline_mode<synchronous>, transform_indices = @transform_1, window_bounds = array<i64: 64, 32>}, {pipeline_mode = #tpu.pipeline_mode<synchronous>, transform_indices = @transform_2, window_bounds = array<i64: 64, 1>}, {pipeline_mode = #tpu.pipeline_mode<synchronous>, transform_indices = @transform_3, window_bounds = array<i64: 64, 64>}, {pipeline_mode = #tpu.pipeline_mode<synchronous>, transform_indices = @transform_4, window_bounds = array<i64: 64, 1>}, {transform_indices = @transform_5, window_bounds = array<i64: 64, 512>}]} {
    %c0 = arith.constant 0 : index
    %c0_0 = arith.constant 0 : index
    %0 = vector.load %arg1[%c0, %c0_0] : memref<32x512xf32, #tpu.memory_space<vmem>>, vector<32x512xf32>
    %c0_1 = arith.constant 0 : index
    %c0_2 = arith.constant 0 : index
    %1 = vector.load %arg2[%c0_1, %c0_2] : memref<64x32xf32, #tpu.memory_space<vmem>>, vector<64x32xf32>
    %c0_3 = arith.constant 0 : index
    %c0_4 = arith.constant 0 : index
    %2 = vector.load %arg3[%c0_3, %c0_4] : memref<64x1xf32, #tpu.memory_space<vmem>>, vector<64x1xf32>
    %cst = arith.constant dense<0.000000e+00> : vector<64x512xf32>
    %3 = tpu.matmul %1, %0, %cst {dimension_numbers = #tpu.dot_dimension_numbers<[1], [0], [0], [1], [0, 0, 1, 1], [], []>} : vector<64x32xf32>, vector<32x512xf32>, vector<64x512xf32> -> vector<64x512xf32>
    %4 = vector.broadcast %2 : vector<64x1xf32> to vector<64x512xf32>
    %5 = arith.addf %3, %4 : vector<64x512xf32>
    %cst_5 = arith.constant 0.000000e+00 : f32
    %6 = vector.broadcast %cst_5 : f32 to vector<64x512xf32>
    %7 = arith.maximumf %5, %6 : vector<64x512xf32>
    %c0_6 = arith.constant 0 : index
    %c0_7 = arith.constant 0 : index
    %8 = vector.load %arg4[%c0_6, %c0_7] : memref<64x64xf32, #tpu.memory_space<vmem>>, vector<64x64xf32>
    %c0_8 = arith.constant 0 : index
    %c0_9 = arith.constant 0 : index
    %9 = vector.load %arg5[%c0_8, %c0_9] : memref<64x1xf32, #tpu.memory_space<vmem>>, vector<64x1xf32>
    %cst_10 = arith.constant dense<0.000000e+00> : vector<64x512xf32>
    %10 = tpu.matmul %8, %7, %cst_10 {dimension_numbers = #tpu.dot_dimension_numbers<[1], [0], [0], [1], [0, 0, 1, 1], [], []>} : vector<64x64xf32>, vector<64x512xf32>, vector<64x512xf32> -> vector<64x512xf32>
    %11 = vector.broadcast %9 : vector<64x1xf32> to vector<64x512xf32>
    %12 = arith.addf %10, %11 : vector<64x512xf32>
    %cst_11 = arith.constant 0.000000e+00 : f32
    %13 = vector.broadcast %cst_11 : f32 to vector<64x512xf32>
    %14 = arith.maximumf %12, %13 : vector<64x512xf32>
    %c0_12 = arith.constant 0 : index
    %c0_13 = arith.constant 0 : index
    %15 = vector.load %arg6[%c0_12, %c0_13] : memref<64x512xf32, #tpu.memory_space<vmem>>, vector<64x512xf32>
    tpu.vector_store %arg6[%c0_12, %c0_13], %14 {strides = array<i32>} : memref<64x512xf32, #tpu.memory_space<vmem>>, vector<64x512xf32>,
    return
  }
  func.func @transform_0(%arg0: i32) -> (i32, i32) {
    %c0_i32 = arith.constant 0 : i32
    %c0_i32_0 = arith.constant 0 : i32
    return %c0_i32, %arg0 : i32, i32
  }
  func.func @transform_1(%arg0: i32) -> (i32, i32) {
    %c0_i32 = arith.constant 0 : i32
    %c0_i32_0 = arith.constant 0 : i32
    %c0_i32_1 = arith.constant 0 : i32
    return %c0_i32, %c0_i32_0 : i32, i32
  }
  func.func @transform_2(%arg0: i32) -> (i32, i32) {
    %c0_i32 = arith.constant 0 : i32
    %c0_i32_0 = arith.constant 0 : i32
    %c0_i32_1 = arith.constant 0 : i32
    return %c0_i32, %c0_i32_0 : i32, i32
  }
  func.func @transform_3(%arg0: i32) -> (i32, i32) {
    %c0_i32 = arith.constant 0 : i32
    %c0_i32_0 = arith.constant 0 : i32
    %c0_i32_1 = arith.constant 0 : i32
    return %c0_i32, %c0_i32_0 : i32, i32
  }
  func.func @transform_4(%arg0: i32) -> (i32, i32) {
    %c0_i32 = arith.constant 0 : i32
    %c0_i32_0 = arith.constant 0 : i32
    %c0_i32_1 = arith.constant 0 : i32
    return %c0_i32, %c0_i32_0 : i32, i32
  }
  func.func @transform_5(%arg0: i32) -> (i32, i32) {
    %c0_i32 = arith.constant 0 : i32
    %c0_i32_0 = arith.constant 0 : i32
    return %c0_i32, %arg0 : i32, i32
  }
}

</mosaic_0001>

<llo_original>
// kernel: tpu_custom_call.1
$region0: #{tpu_custom_call.1}
  #allocation0 [shape = 'u32[]', space=smem, size = 0x4, offset = 0x4, fixed_abs, tag = 'smem constant byte address 0x4 - core index']
  #allocation1 [shape = 'u32[72,128]{1,0:T(1,128)}', space=vmem, size = 0x9000, scoped, tag = 'internal scratch']
  %s0 = inlined_call_operand.hbm [shape: f32[32,2048], index: 0, kind: input, shape index: {}]
  %s1 = inlined_call_operand.vmem [shape: f32[64,32], index: 1, kind: input, shape index: {}]
  %s2 = inlined_call_operand.vmem [shape: f32[64,1], index: 2, kind: input, shape index: {}]
  %s3 = inlined_call_operand.vmem [shape: f32[64,64], index: 3, kind: input, shape index: {}]
  %s4 = inlined_call_operand.vmem [shape: f32[64,1], index: 4, kind: input, shape index: {}]
  %s5 = inlined_call_operand.hbm [shape: f32[64,2048], index: 5, kind: output, shape index: {}]
  %s6 = sld [smem:[#allocation0]]
  $region57: #{tpu_custom_call.1} parent=0
    _
  %s8 = ssub.s32 1, %s6
  %s9 = scalar_select 0, %s8, %s6
  $region1: #{tpu_custom_call.1} parent=0
    #allocation2 [shape = 'u8[131072]{0}', space=vmem, size = 0x20000, scoped, tag = 'input window, operand 0']
    #allocation3 [shape = 's32[2]{0}', space=sflag, size = 0x8, scoped, tag = 'scoped memory for tpu_custom_call.1']
    #allocation4 [shape = 's32[2]{0}', space=sflag, size = 0x8, scoped, tag = 'scoped memory for tpu_custom_call.1']
    #allocation5 [shape = 'u8[262144]{0}', space=vmem, size = 0x40000, scoped, tag = 'output window, operand 0']
    %10 = vsyncpa [#allocation3], 0
    %s11 = scalar_lea.sflag [#allocation3], 1
    %12 = vsyncpa %s11, 0
    %13 = vsyncpa [#allocation4], 0
    %s14 = scalar_lea.sflag [#allocation4], 1
    %15 = vsyncpa %s14, 0
    loop: start=0, step=1, limit=6
    $region2: #{tpu_custom_call.1} parent=1 // loop_pre_header
      _
    $region3: #{tpu_custom_call.1} parent=1 // loop_header
      %s17 = sphi 0, %s21
      %p18 = scmp.ge.s32.totalorder %s17, 6
      %s27 = sphi 0, %s29
      %s30 = sphi 0, %s27
      %s31 = sphi 0, %s30
      %s47 = sphi 0, %s31
      %s51 = sphi 0, %s51
      %s53 = sphi 0, %s51
      %s54 = sphi 0, %s53
      %s68 = sphi 0, %s54
      %s72 = sphi 0, %s72
      %s74 = sphi 0, %s72
      %s75 = sphi 0, %s74
      %s89 = sphi 0, %s75
      %s93 = sphi 0, %s93
      %s95 = sphi 0, %s93
      %s96 = sphi 0, %s95
      %s110 = sphi 0, %s96
      %s114 = sphi 0, %s114
      %s116 = sphi 0, %s114
      %s117 = sphi 0, %s116
      %s131 = sphi 0, %s117
      %s137 = sphi 0, %s139
      %s140 = sphi 0, %s137
      %s141 = sphi 0, %s140
      %s157 = sphi 0, %s141
    $region4: #{tpu_custom_call.1} parent=1 // loop_header_branch
      %20 = sbr.rel (%p18) target = $region8
    $region5: #{tpu_custom_call.1} parent=1 // loop_body
      %s22 = ssub.s32 %s17, 1
      %s23 = ssub.s32 %s17, 2
      %s24 = sadd.s32 %s17, 1
      %s25 = ssub.s32 %s17, %s24
      %p26 = scmp.eq.s32.totalorder %s25, 0
      %s28 = sadd.s32 %s27, 1
      %s29 = scalar_select %p26, %s27, %s28
      %p32 = pneg %p26
      %p33 = scmp.eq.s32.totalorder %s17, 3
      %p34 = por %p32, %p33
      %p35 = scmp.ne.s32.totalorder %s27, %s30
      %p36 = scmp.eq.s32.totalorder %s17, 0
      %p37 = por %p35, %p36
      %p38 = scmp.ne.s32.totalorder %s27, %s30
      %p39 = scmp.eq.s32.totalorder %s22, 3
      %p40 = por %p38, %p39
      %p41 = scmp.ne.s32.totalorder %s30, %s31
      %p42 = scmp.eq.s32.totalorder %s22, 0
      %p43 = por %p41, %p42
      %p44 = scmp.ne.s32.totalorder %s30, %s31
      %p45 = scmp.eq.s32.totalorder %s23, 3
      %p46 = por %p44, %p45
      %p48 = scmp.ne.s32.totalorder %s31, %s47
      %p49 = scmp.eq.s32.totalorder %s23, 0
      %p50 = por %p48, %p49
      %s52 = sadd.s32 %s51, 1
      %p55 = scmp.eq.s32.totalorder %s17, 3
      %p56 = scmp.ne.s32.totalorder %s51, %s53
      %p57 = scmp.eq.s32.totalorder %s17, 0
      %p58 = por %p56, %p57
      %p59 = scmp.ne.s32.totalorder %s51, %s53
      %p60 = scmp.eq.s32.totalorder %s22, 3
      %p61 = por %p59, %p60
      %p62 = scmp.ne.s32.totalorder %s53, %s54
      %p63 = scmp.eq.s32.totalorder %s22, 0
      %p64 = por %p62, %p63
      %p65 = scmp.ne.s32.totalorder %s53, %s54
      %p66 = scmp.eq.s32.totalorder %s23, 3
      %p67 = por %p65, %p66
      %p69 = scmp.ne.s32.totalorder %s54, %s68
      %p70 = scmp.eq.s32.totalorder %s23, 0
      %p71 = por %p69, %p70
      %s73 = sadd.s32 %s72, 1
      %p76 = scmp.eq.s32.totalorder %s17, 3
      %p77 = scmp.ne.s32.totalorder %s72, %s74
      %p78 = scmp.eq.s32.totalorder %s17, 0
      %p79 = por %p77, %p78
      %p80 = scmp.ne.s32.totalorder %s72, %s74
      %p81 = scmp.eq.s32.totalorder %s22, 3
      %p82 = por %p80, %p81
      %p83 = scmp.ne.s32.totalorder %s74, %s75
      %p84 = scmp.eq.s32.totalorder %s22, 0
      %p85 = por %p83, %p84
      %p86 = scmp.ne.s32.totalorder %s74, %s75
      %p87 = scmp.eq.s32.totalorder %s23, 3
      %p88 = por %p86, %p87
      %p90 = scmp.ne.s32.totalorder %s75, %s89
      %p91 = scmp.eq.s32.totalorder %s23, 0
      %p92 = por %p90, %p91
      %s94 = sadd.s32 %s93, 1
      %p97 = scmp.eq.s32.totalorder %s17, 3
      %p98 = scmp.ne.s32.totalorder %s93, %s95
      %p99 = scmp.eq.s32.totalorder %s17, 0
      %p100 = por %p98, %p99
      %p101 = scmp.ne.s32.totalorder %s93, %s95
      %p102 = scmp.eq.s32.totalorder %s22, 3
      %p103 = por %p101, %p102
      %p104 = scmp.ne.s32.totalorder %s95, %s96
      %p105 = scmp.eq.s32.totalorder %s22, 0
      %p106 = por %p104, %p105
      %p107 = scmp.ne.s32.totalorder %s95, %s96
      %p108 = scmp.eq.s32.totalorder %s23, 3
      %p109 = por %p107, %p108
      %p111 = scmp.ne.s32.totalorder %s96, %s110
      %p112 = scmp.eq.s32.totalorder %s23, 0
      %p113 = por %p111, %p112
      %s115 = sadd.s32 %s114, 1
      %p118 = scmp.eq.s32.totalorder %s17, 3
      %p119 = scmp.ne.s32.totalorder %s114, %s116
      %p120 = scmp.eq.s32.totalorder %s17, 0
      %p121 = por %p119, %p120
      %p122 = scmp.ne.s32.totalorder %s114, %s116
      %p123 = scmp.eq.s32.totalorder %s22, 3
      %p124 = por %p122, %p123
      %p125 = scmp.ne.s32.totalorder %s116, %s117
      %p126 = scmp.eq.s32.totalorder %s22, 0
      %p127 = por %p125, %p126
      %p128 = scmp.ne.s32.totalorder %s116, %s117
      %p129 = scmp.eq.s32.totalorder %s23, 3
      %p130 = por %p128, %p129
      %p132 = scmp.ne.s32.totalorder %s117, %s131
      %p133 = scmp.eq.s32.totalorder %s23, 0
      %p134 = por %p132, %p133
      %s135 = ssub.s32 %s17, %s24
      %p136 = scmp.eq.s32.totalorder %s135, 0
      %s138 = sadd.s32 %s137, 1
      %s139 = scalar_select %p136, %s137, %s138
      %p142 = pneg %p136
      %p143 = scmp.eq.s32.totalorder %s17, 3
      %p144 = por %p142, %p143
      %p145 = scmp.ne.s32.totalorder %s137, %s140
      %p146 = scmp.eq.s32.totalorder %s17, 0
      %p147 = por %p145, %p146
      %p148 = scmp.ne.s32.totalorder %s137, %s140
      %p149 = scmp.eq.s32.totalorder %s22, 3
      %p150 = por %p148, %p149
      %p151 = scmp.ne.s32.totalorder %s140, %s141
      %p152 = scmp.eq.s32.totalorder %s22, 0
      %p153 = por %p151, %p152
      %p154 = scmp.ne.s32.totalorder %s140, %s141
      %p155 = scmp.eq.s32.totalorder %s23, 3
      %p156 = por %p154, %p155
      %p158 = scmp.ne.s32.totalorder %s141, %s157
      %p159 = scmp.eq.s32.totalorder %s23, 0
      %p160 = por %p158, %p159
      %p161 = scmp.le.s32.totalorder 1, %s17
      %p162 = scmp.lt.s32.totalorder %s17, 5
      %p163 = pnand %p161, %p162
      %p164 = pneg %p163
      // Predicated region
      $region9: #{tpu_custom_call.1} parent=5 // pred_check
        _
      $region10: #{tpu_custom_call.1} parent=5 // pred_check_branch
        %166 = sbr.rel (%p163) target = $region12
      $region11: #{tpu_custom_call.1} parent=5 // pred_region
        %s167 = ssub.s32 %s17, 1
        // Predicated region
        $region13: #{tpu_custom_call.1} parent=11 // pred_check
          %p168 = pneg %p64
        $region14: #{tpu_custom_call.1} parent=11 // pred_check_branch
          %170 = sbr.rel (%p168) target = $region16
        $region15: #{tpu_custom_call.1} parent=11 // pred_region
          _
        $region16: #{tpu_custom_call.1} parent=11 // pred_fallthru
          _
        // Predicated region
        $region17: #{tpu_custom_call.1} parent=11 // pred_check
          %p171 = pneg %p85
        $region18: #{tpu_custom_call.1} parent=11 // pred_check_branch
          %173 = sbr.rel (%p171) target = $region20
        $region19: #{tpu_custom_call.1} parent=11 // pred_region
          _
        $region20: #{tpu_custom_call.1} parent=11 // pred_fallthru
          _
        // Predicated region
        $region21: #{tpu_custom_call.1} parent=11 // pred_check
          %p174 = pneg %p106
        $region22: #{tpu_custom_call.1} parent=11 // pred_check_branch
          %176 = sbr.rel (%p174) target = $region24
        $region23: #{tpu_custom_call.1} parent=11 // pred_region
          _
        $region24: #{tpu_custom_call.1} parent=11 // pred_fallthru
          _
        // Predicated region
        $region25: #{tpu_custom_call.1} parent=11 // pred_check
          %p177 = pneg %p127
        $region26: #{tpu_custom_call.1} parent=11 // pred_check_branch
          %179 = sbr.rel (%p177) target = $region28
        $region27: #{tpu_custom_call.1} parent=11 // pred_region
          _
        $region28: #{tpu_custom_call.1} parent=11 // pred_fallthru
          _
      $region12: #{tpu_custom_call.1} parent=5 // pred_fallthru
        _
      %p180 = scmp.lt.s32.totalorder %s17, 4
      // Predicated region
      $region29: #{tpu_custom_call.1} parent=5 // pred_check
        %p181 = pneg %p180
      $region30: #{tpu_custom_call.1} parent=5 // pred_check_branch
        %183 = sbr.rel (%p181) target = $region32
      $region31: #{tpu_custom_call.1} parent=5 // pred_region
        // Predicated region
        $region33: #{tpu_custom_call.1} parent=31 // pred_check
          %p184 = pneg %p37
        $region34: #{tpu_custom_call.1} parent=31 // pred_check_branch
          %186 = sbr.rel (%p184) target = $region36
        $region35: #{tpu_custom_call.1} parent=31 // pred_region
          %s187 = sand.u32 %s27, 1
          %s188 = scalar_lea.sflag [#allocation3], %s187
          %s189 = sand.u32 %s27, 1
          %s190 = smul.addr %s189, 128
          %s191 = scalar_lea.vmem [#allocation2], %s190
          %s192 = smul.u32 4, %s17
          %194 = vsyncadd %s188, 0
          %s195 = smul.addr %s192, 8
          %s196 = scalar_lea.hbm %s0, %s195
          %s197 = sshll.u32 %s196, 4
          %s198 = int_to_ptr.hbm [resolvable:$true] %s197
          %s199 = sshll.u32 %s191, 4
          %s200 = int_to_ptr.vmem [resolvable:$true] %s199
          %205 = dma.hbm_to_vmem [thread:$0]  %s198, 2048, %s200, %s188, 2048, 512, 32
        $region36: #{tpu_custom_call.1} parent=31 // pred_fallthru
          _
      $region32: #{tpu_custom_call.1} parent=5 // pred_fallthru
        _
      %p206 = scmp.le.s32.totalorder 1, %s17
      %p207 = scmp.lt.s32.totalorder %s17, 5
      %p208 = pnand %p206, %p207
      %p209 = pneg %p208
      // Predicated region
      $region37: #{tpu_custom_call.1} parent=5 // pred_check
        _
      $region38: #{tpu_custom_call.1} parent=5 // pred_check_branch
        %211 = sbr.rel (%p208) target = $region40
      $region39: #{tpu_custom_call.1} parent=5 // pred_region
        %s212 = ssub.s32 %s17, 1
        %s213 = sand.u32 %s30, 1
        %s214 = scalar_lea.sflag [#allocation3], %s213
        %s215 = sand.u32 %s30, 1
        %s216 = smul.addr %s215, 128
        %s217 = scalar_lea.vmem [#allocation2], %s216
        // Predicated region
        $region41: #{tpu_custom_call.1} parent=39 // pred_check
          %p218 = pneg %p43
        $region42: #{tpu_custom_call.1} parent=39 // pred_check_branch
          %220 = sbr.rel (%p218) target = $region44
        $region43: #{tpu_custom_call.1} parent=39 // pred_region
          %222 = dma.done %s214, 2048
        $region44: #{tpu_custom_call.1} parent=39 // pred_fallthru
          _
        %s223 = sand.u32 %s30, 1
        %s224 = scalar_lea.sflag [#allocation3], %s223
        %s225 = sand.u32 %s30, 1
        %s226 = smul.addr %s225, 128
        %s227 = scalar_lea.vmem [#allocation2], %s226
        %p228 = pneg %p43
        %p229 = pneg %p40
        %p230 = pneg %p64
        %p231 = pneg %p61
        %p232 = pneg %p85
        %p233 = pneg %p82
        %p234 = pneg %p106
        %p235 = pneg %p103
        %p236 = pneg %p127
        %p237 = pneg %p124
        %p238 = pneg %p153
        %p239 = pneg %p150
        %s240 = sand.u32 %s140, 1
        %s241 = scalar_lea.sflag [#allocation4], %s240
        %s242 = sand.u32 %s140, 1
        %s243 = smul.addr %s242, 256
        %s244 = scalar_lea.vmem [#allocation5], %s243
        %s245 = smul.u32 4, %s22
        %s246 = smul.u32 4, %s22
        %v247 = vld [vmem:[%s217] sm:$0xff]
        %v248 = vld [vmem:[%s217 + $0x8] sm:$0xff]
        %v249 = vld [vmem:[%s217 + $0x10] sm:$0xff]
        %v250 = vld [vmem:[%s217 + $0x18] sm:$0xff]
        %v251 = vld [vmem:[%s217 + $0x20] sm:$0xff]
        %v252 = vld [vmem:[%s217 + $0x28] sm:$0xff]
        %v253 = vld [vmem:[%s217 + $0x30] sm:$0xff]
        %v254 = vld [vmem:[%s217 + $0x38] sm:$0xff]
        %v255 = vld [vmem:[%s217 + $0x40] sm:$0xff]
        %v256 = vld [vmem:[%s217 + $0x48] sm:$0xff]
        %v257 = vld [vmem:[%s217 + $0x50] sm:$0xff]
        %v258 = vld [vmem:[%s217 + $0x58] sm:$0xff]
        %v259 = vld [vmem:[%s217 + $0x60] sm:$0xff]
        %v260 = vld [vmem:[%s217 + $0x68] sm:$0xff]
        %v261 = vld [vmem:[%s217 + $0x70] sm:$0xff]
        %v262 = vld [vmem:[%s217 + $0x78] sm:$0xff]
        %v263 = vld [vmem:[%s1] sm:$0xff]
        %v264 = vld [vmem:[%s1 + $0x8] sm:$0xff]
        %v265 = vld [vmem:[%s1 + $0x10] sm:$0xff]
        %v266 = vld [vmem:[%s1 + $0x18] sm:$0xff]
        %v267 = vld [vmem:[%s1 + $0x20] sm:$0xff]
        %v268 = vld [vmem:[%s1 + $0x28] sm:$0xff]
        %v269 = vld [vmem:[%s1 + $0x30] sm:$0xff]
        %v270 = vld [vmem:[%s1 + $0x38] sm:$0xff]
        %v271 = vld [vmem:[%s2] sm:$0xff]
        %v272 = vld [vmem:[%s2 + $0x8] sm:$0xff]
        %v273 = vld [vmem:[%s2 + $0x10] sm:$0xff]
        %v274 = vld [vmem:[%s2 + $0x18] sm:$0xff]
        %v275 = vld [vmem:[%s2 + $0x20] sm:$0xff]
        %v276 = vld [vmem:[%s2 + $0x28] sm:$0xff]
        %v277 = vld [vmem:[%s2 + $0x30] sm:$0xff]
        %v278 = vld [vmem:[%s2 + $0x38] sm:$0xff]
        %280 = vset.pattern.permute.xlu0 0
        %281 = vperm.xlu0 %280, %v271
        %v282 = vpop.permute.xlu0 %281
        %285 = vset.pattern.permute.xlu0 0
        %286 = vperm.xlu0 %285, %v272
        %v287 = vpop.permute.xlu0 %286
        %290 = vset.pattern.permute.xlu0 0
        %291 = vperm.xlu0 %290, %v273
        %v292 = vpop.permute.xlu0 %291
        %295 = vset.pattern.permute.xlu0 0
        %296 = vperm.xlu0 %295, %v274
        %v297 = vpop.permute.xlu0 %296
        %300 = vset.pattern.permute.xlu0 0
        %301 = vperm.xlu0 %300, %v275
        %v302 = vpop.permute.xlu0 %301
        %305 = vset.pattern.permute.xlu0 0
        %306 = vperm.xlu0 %305, %v276
        %v307 = vpop.permute.xlu0 %306
        %310 = vset.pattern.permute.xlu0 0
        %311 = vperm.xlu0 %310, %v277
        %v312 = vpop.permute.xlu0 %311
        %315 = vset.pattern.permute.xlu0 0
        %316 = vperm.xlu0 %315, %v278
        %v317 = vpop.permute.xlu0 %316
        %vm319 = vcmask 261120
        %v321 = vsel %vm319, %v263, 0
        %v324 = vsel %vm319, %v264, 0
        %v327 = vsel %vm319, %v265, 0
        %v330 = vsel %vm319, %v266, 0
        %v333 = vsel %vm319, %v267, 0
        %v336 = vsel %vm319, %v268, 0
        %v339 = vsel %vm319, %v269, 0
        %v342 = vsel %vm319, %v270, 0
        %344 = vmatpush.msra.mxu0 0.0
        %345 = vmatpush.msra.mxu0 0.0
        %346 = vmatpush.msra.mxu0 0.0
        %347 = vmatpush.msra.mxu0 0.0
        %348 = vmatpush.msra.mxu0 0.0
        %349 = vmatpush.msra.mxu0 0.0
        %350 = vmatpush.msra.mxu0 0.0
        %351 = vmatpush.msra.mxu0 0.0
        %352 = vmatpush.msra.mxu0 0.0
        %353 = vmatpush.msra.mxu0 0.0
        %354 = vmatpush.msra.mxu0 0.0
        %355 = vmatpush.msra.mxu0 0.0
        %356 = vmatpush.msra.mxu0 %v259
        %357 = vmatpush.msra.mxu0 %v255
        %358 = vmatpush.msra.mxu0 %v251
        %359 = vmatpush.msra.mxu0 %v247
        %360 = vmatmul.f32.gmra.mxu0 %v321
        %v361 = vpop.f32.mrf.mxu0
        %v362 = vadd.f32 %v282, %v361
        %363 = vmatmul.f32.gmra.mxu0 %v324
        %v364 = vpop.f32.mrf.mxu0
        %v365 = vadd.f32 %v287, %v364
        %366 = vmatmul.f32.gmra.mxu0 %v327
        %v367 = vpop.f32.mrf.mxu0
        %v368 = vadd.f32 %v292, %v367
        %369 = vmatmul.f32.gmra.mxu0 %v330
        %v370 = vpop.f32.mrf.mxu0
        %v371 = vadd.f32 %v297, %v370
        %372 = vmatmul.f32.gmra.mxu0 %v333
        %v373 = vpop.f32.mrf.mxu0
        %v374 = vadd.f32 %v302, %v373
        %375 = vmatmul.f32.gmra.mxu0 %v336
        %v376 = vpop.f32.mrf.mxu0
        %v377 = vadd.f32 %v307, %v376
        %378 = vmatmul.f32.gmra.mxu0 %v339
        %v379 = vpop.f32.mrf.mxu0
        %v380 = vadd.f32 %v312, %v379
        %381 = vmatmul.f32.gmra.mxu0 %v342
        %v382 = vpop.f32.mrf.mxu0
        %v383 = vadd.f32 %v317, %v382
        %384 = vdwg.mxu0
        %385 = vmatpush.msra.mxu0 0.0
        %386 = vmatpush.msra.mxu0 0.0
        %387 = vmatpush.msra.mxu0 0.0
        %388 = vmatpush.msra.mxu0 0.0
        %389 = vmatpush.msra.mxu0 0.0
        %390 = vmatpush.msra.mxu0 0.0
        %391 = vmatpush.msra.mxu0 0.0
        %392 = vmatpush.msra.mxu0 0.0
        %393 = vmatpush.msra.mxu0 0.0
        %394 = vmatpush.msra.mxu0 0.0
        %395 = vmatpush.msra.mxu0 0.0
        %396 = vmatpush.msra.mxu0 0.0
        %397 = vmatpush.msra.mxu0 %v260
        %398 = vmatpush.msra.mxu0 %v256
        %399 = vmatpush.msra.mxu0 %v252
        %400 = vmatpush.msra.mxu0 %v248
        %401 = vmatmul.f32.gmra.mxu0 %v321
        %v402 = vpop.f32.mrf.mxu0
        %v403 = vadd.f32 %v282, %v402
        %404 = vmatmul.f32.gmra.mxu0 %v324
        %v405 = vpop.f32.mrf.mxu0
        %v406 = vadd.f32 %v287, %v405
        %407 = vmatmul.f32.gmra.mxu0 %v327
        %v408 = vpop.f32.mrf.mxu0
        %v409 = vadd.f32 %v292, %v408
        %410 = vmatmul.f32.gmra.mxu0 %v330
        %v411 = vpop.f32.mrf.mxu0
        %v412 = vadd.f32 %v297, %v411
        %413 = vmatmul.f32.gmra.mxu0 %v333
        %v414 = vpop.f32.mrf.mxu0
        %v415 = vadd.f32 %v302, %v414
        %416 = vmatmul.f32.gmra.mxu0 %v336
        %v417 = vpop.f32.mrf.mxu0
        %v418 = vadd.f32 %v307, %v417
        %419 = vmatmul.f32.gmra.mxu0 %v339
        %v420 = vpop.f32.mrf.mxu0
        %v421 = vadd.f32 %v312, %v420
        %422 = vmatmul.f32.gmra.mxu0 %v342
        %v423 = vpop.f32.mrf.mxu0
        %v424 = vadd.f32 %v317, %v423
        %425 = vdwg.mxu0
        %426 = vmatpush.msra.mxu0 0.0
        %427 = vmatpush.msra.mxu0 0.0
        %428 = vmatpush.msra.mxu0 0.0
        %429 = vmatpush.msra.mxu0 0.0
        %430 = vmatpush.msra.mxu0 0.0
        %431 = vmatpush.msra.mxu0 0.0
        %432 = vmatpush.msra.mxu0 0.0
        %433 = vmatpush.msra.mxu0 0.0
        %434 = vmatpush.msra.mxu0 0.0
        %435 = vmatpush.msra.mxu0 0.0
        %436 = vmatpush.msra.mxu0 0.0
        %437 = vmatpush.msra.mxu0 0.0
        %438 = vmatpush.msra.mxu0 %v261
        %439 = vmatpush.msra.mxu0 %v257
        %440 = vmatpush.msra.mxu0 %v253
        %441 = vmatpush.msra.mxu0 %v249
        %442 = vmatmul.f32.gmra.mxu0 %v321
        %v443 = vpop.f32.mrf.mxu0
        %v444 = vadd.f32 %v282, %v443
        %445 = vmatmul.f32.gmra.mxu0 %v324
        %v446 = vpop.f32.mrf.mxu0
        %v447 = vadd.f32 %v287, %v446
        %448 = vmatmul.f32.gmra.mxu0 %v327
        %v449 = vpop.f32.mrf.mxu0
        %v450 = vadd.f32 %v292, %v449
        %451 = vmatmul.f32.gmra.mxu0 %v330
        %v452 = vpop.f32.mrf.mxu0
        %v453 = vadd.f32 %v297, %v452
        %454 = vmatmul.f32.gmra.mxu0 %v333
        %v455 = vpop.f32.mrf.mxu0
        %v456 = vadd.f32 %v302, %v455
        %457 = vmatmul.f32.gmra.mxu0 %v336
        %v458 = vpop.f32.mrf.mxu0
        %v459 = vadd.f32 %v307, %v458
        %460 = vmatmul.f32.gmra.mxu0 %v339
        %v461 = vpop.f32.mrf.mxu0
        %v462 = vadd.f32 %v312, %v461
        %463 = vmatmul.f32.gmra.mxu0 %v342
        %v464 = vpop.f32.mrf.mxu0
        %v465 = vadd.f32 %v317, %v464
        %466 = vdwg.mxu0
        %467 = vmatpush.msra.mxu0 0.0
        %468 = vmatpush.msra.mxu0 0.0
        %469 = vmatpush.msra.mxu0 0.0
        %470 = vmatpush.msra.mxu0 0.0
        %471 = vmatpush.msra.mxu0 0.0
        %472 = vmatpush.msra.mxu0 0.0
        %473 = vmatpush.msra.mxu0 0.0
        %474 = vmatpush.msra.mxu0 0.0
        %475 = vmatpush.msra.mxu0 0.0
        %476 = vmatpush.msra.mxu0 0.0
        %477 = vmatpush.msra.mxu0 0.0
        %478 = vmatpush.msra.mxu0 0.0
        %479 = vmatpush.msra.mxu0 %v262
        %480 = vmatpush.msra.mxu0 %v258
        %481 = vmatpush.msra.mxu0 %v254
        %482 = vmatpush.msra.mxu0 %v250
        %483 = vmatmul.f32.gmra.mxu0 %v321
        %v484 = vpop.f32.mrf.mxu0
        %v485 = vadd.f32 %v282, %v484
        %486 = vmatmul.f32.gmra.mxu0 %v324
        %v487 = vpop.f32.mrf.mxu0
        %v488 = vadd.f32 %v287, %v487
        %489 = vmatmul.f32.gmra.mxu0 %v327
        %v490 = vpop.f32.mrf.mxu0
        %v491 = vadd.f32 %v292, %v490
        %492 = vmatmul.f32.gmra.mxu0 %v330
        %v493 = vpop.f32.mrf.mxu0
        %v494 = vadd.f32 %v297, %v493
        %495 = vmatmul.f32.gmra.mxu0 %v333
        %v496 = vpop.f32.mrf.mxu0
        %v497 = vadd.f32 %v302, %v496
        %498 = vmatmul.f32.gmra.mxu0 %v336
        %v499 = vpop.f32.mrf.mxu0
        %v500 = vadd.f32 %v307, %v499
        %501 = vmatmul.f32.gmra.mxu0 %v339
        %v502 = vpop.f32.mrf.mxu0
        %v503 = vadd.f32 %v312, %v502
        %504 = vmatmul.f32.gmra.mxu0 %v342
        %v505 = vpop.f32.mrf.mxu0
        %v506 = vadd.f32 %v317, %v505
        %507 = vdwg.mxu0
        %v508 = vmax.f32 %v362, 0.0
        %v509 = vmax.f32 %v403, 0.0
        %v510 = vmax.f32 %v444, 0.0
        %v511 = vmax.f32 %v485, 0.0
        %v512 = vmax.f32 %v365, 0.0
        %v513 = vmax.f32 %v406, 0.0
        %v514 = vmax.f32 %v447, 0.0
        %v515 = vmax.f32 %v488, 0.0
        %v516 = vmax.f32 %v368, 0.0
        %v517 = vmax.f32 %v409, 0.0
        %v518 = vmax.f32 %v450, 0.0
        %v519 = vmax.f32 %v491, 0.0
        %v520 = vmax.f32 %v371, 0.0
        %v521 = vmax.f32 %v412, 0.0
        %v522 = vmax.f32 %v453, 0.0
        %v523 = vmax.f32 %v494, 0.0
        %v524 = vmax.f32 %v374, 0.0
        %v525 = vmax.f32 %v415, 0.0
        %v526 = vmax.f32 %v456, 0.0
        %v527 = vmax.f32 %v497, 0.0
        %v528 = vmax.f32 %v377, 0.0
        %v529 = vmax.f32 %v418, 0.0
        %v530 = vmax.f32 %v459, 0.0
        %v531 = vmax.f32 %v500, 0.0
        %v532 = vmax.f32 %v380, 0.0
        %v533 = vmax.f32 %v421, 0.0
        %v534 = vmax.f32 %v462, 0.0
        %v535 = vmax.f32 %v503, 0.0
        %v536 = vmax.f32 %v383, 0.0
        %v537 = vmax.f32 %v424, 0.0
        %v538 = vmax.f32 %v465, 0.0
        %v539 = vmax.f32 %v506, 0.0
        %v540 = vld [vmem:[%s3] sm:$0xff]
        %v541 = vld [vmem:[%s3 + $0x8] sm:$0xff]
        %v542 = vld [vmem:[%s3 + $0x10] sm:$0xff]
        %v543 = vld [vmem:[%s3 + $0x18] sm:$0xff]
        %v544 = vld [vmem:[%s3 + $0x20] sm:$0xff]
        %v545 = vld [vmem:[%s3 + $0x28] sm:$0xff]
        %v546 = vld [vmem:[%s3 + $0x30] sm:$0xff]
        %v547 = vld [vmem:[%s3 + $0x38] sm:$0xff]
        %v548 = vld [vmem:[%s4] sm:$0xff]
        %v549 = vld [vmem:[%s4 + $0x8] sm:$0xff]
        %v550 = vld [vmem:[%s4 + $0x10] sm:$0xff]
        %v551 = vld [vmem:[%s4 + $0x18] sm:$0xff]
        %v552 = vld [vmem:[%s4 + $0x20] sm:$0xff]
        %v553 = vld [vmem:[%s4 + $0x28] sm:$0xff]
        %v554 = vld [vmem:[%s4 + $0x30] sm:$0xff]
        %v555 = vld [vmem:[%s4 + $0x38] sm:$0xff]
        %557 = vset.pattern.permute.xlu0 0
        %558 = vperm.xlu0 %557, %v548
        %v559 = vpop.permute.xlu0 %558
        %562 = vset.pattern.permute.xlu0 0
        %563 = vperm.xlu0 %562, %v549
        %v564 = vpop.permute.xlu0 %563
        %567 = vset.pattern.permute.xlu0 0
        %568 = vperm.xlu0 %567, %v550
        %v569 = vpop.permute.xlu0 %568
        %572 = vset.pattern.permute.xlu0 0
        %573 = vperm.xlu0 %572, %v551
        %v574 = vpop.permute.xlu0 %573
        %577 = vset.pattern.permute.xlu0 0
        %578 = vperm.xlu0 %577, %v552
        %v579 = vpop.permute.xlu0 %578
        %582 = vset.pattern.permute.xlu0 0
        %583 = vperm.xlu0 %582, %v553
        %v584 = vpop.permute.xlu0 %583
        %587 = vset.pattern.permute.xlu0 0
        %588 = vperm.xlu0 %587, %v554
        %v589 = vpop.permute.xlu0 %588
        %592 = vset.pattern.permute.xlu0 0
        %593 = vperm.xlu0 %592, %v555
        %v594 = vpop.permute.xlu0 %593
        %vm596 = vcmask 523264
        %v598 = vsel %vm596, %v540, 0
        %v601 = vsel %vm596, %v541, 0
        %v604 = vsel %vm596, %v542, 0
        %v607 = vsel %vm596, %v543, 0
        %v610 = vsel %vm596, %v544, 0
        %v613 = vsel %vm596, %v545, 0
        %v616 = vsel %vm596, %v546, 0
        %v619 = vsel %vm596, %v547, 0
        %621 = vmatpush.msra.mxu0 0.0
        %622 = vmatpush.msra.mxu0 0.0
        %623 = vmatpush.msra.mxu0 0.0
        %624 = vmatpush.msra.mxu0 0.0
        %625 = vmatpush.msra.mxu0 0.0
        %626 = vmatpush.msra.mxu0 0.0
        %627 = vmatpush.msra.mxu0 0.0
        %628 = vmatpush.msra.mxu0 0.0
        %629 = vmatpush.msra.mxu0 %v536
        %630 = vmatpush.msra.mxu0 %v532
        %631 = vmatpush.msra.mxu0 %v528
        %632 = vmatpush.msra.mxu0 %v524
        %633 = vmatpush.msra.mxu0 %v520
        %634 = vmatpush.msra.mxu0 %v516
        %635 = vmatpush.msra.mxu0 %v512
        %636 = vmatpush.msra.mxu0 %v508
        %637 = vmatmul.f32.gmra.mxu0 %v598
        %v638 = vpop.f32.mrf.mxu0
        %v639 = vadd.f32 %v559, %v638
        %640 = vmatmul.f32.gmra.mxu0 %v601
        %v641 = vpop.f32.mrf.mxu0
        %v642 = vadd.f32 %v564, %v641
        %643 = vmatmul.f32.gmra.mxu0 %v604
        %v644 = vpop.f32.mrf.mxu0
        %v645 = vadd.f32 %v569, %v644
        %646 = vmatmul.f32.gmra.mxu0 %v607
        %v647 = vpop.f32.mrf.mxu0
        %v648 = vadd.f32 %v574, %v647
        %649 = vmatmul.f32.gmra.mxu0 %v610
        %v650 = vpop.f32.mrf.mxu0
        %v651 = vadd.f32 %v579, %v650
        %652 = vmatmul.f32.gmra.mxu0 %v613
        %v653 = vpop.f32.mrf.mxu0
        %v654 = vadd.f32 %v584, %v653
        %655 = vmatmul.f32.gmra.mxu0 %v616
        %v656 = vpop.f32.mrf.mxu0
        %v657 = vadd.f32 %v589, %v656
        %658 = vmatmul.f32.gmra.mxu0 %v619
        %v659 = vpop.f32.mrf.mxu0
        %v660 = vadd.f32 %v594, %v659
        %661 = vdwg.mxu0
        %662 = vmatpush.msra.mxu0 0.0
        %663 = vmatpush.msra.mxu0 0.0
        %664 = vmatpush.msra.mxu0 0.0
        %665 = vmatpush.msra.mxu0 0.0
        %666 = vmatpush.msra.mxu0 0.0
        %667 = vmatpush.msra.mxu0 0.0
        %668 = vmatpush.msra.mxu0 0.0
        %669 = vmatpush.msra.mxu0 0.0
        %670 = vmatpush.msra.mxu0 %v537
        %671 = vmatpush.msra.mxu0 %v533
        %672 = vmatpush.msra.mxu0 %v529
        %673 = vmatpush.msra.mxu0 %v525
        %674 = vmatpush.msra.mxu0 %v521
        %675 = vmatpush.msra.mxu0 %v517
        %676 = vmatpush.msra.mxu0 %v513
        %677 = vmatpush.msra.mxu0 %v509
        %678 = vmatmul.f32.gmra.mxu0 %v598
        %v679 = vpop.f32.mrf.mxu0
        %v680 = vadd.f32 %v559, %v679
        %681 = vmatmul.f32.gmra.mxu0 %v601
        %v682 = vpop.f32.mrf.mxu0
        %v683 = vadd.f32 %v564, %v682
        %684 = vmatmul.f32.gmra.mxu0 %v604
        %v685 = vpop.f32.mrf.mxu0
        %v686 = vadd.f32 %v569, %v685
        %687 = vmatmul.f32.gmra.mxu0 %v607
        %v688 = vpop.f32.mrf.mxu0
        %v689 = vadd.f32 %v574, %v688
        %690 = vmatmul.f32.gmra.mxu0 %v610
        %v691 = vpop.f32.mrf.mxu0
        %v692 = vadd.f32 %v579, %v691
        %693 = vmatmul.f32.gmra.mxu0 %v613
        %v694 = vpop.f32.mrf.mxu0
        %v695 = vadd.f32 %v584, %v694
        %696 = vmatmul.f32.gmra.mxu0 %v616
        %v697 = vpop.f32.mrf.mxu0
        %v698 = vadd.f32 %v589, %v697
        %699 = vmatmul.f32.gmra.mxu0 %v619
        %v700 = vpop.f32.mrf.mxu0
        %v701 = vadd.f32 %v594, %v700
        %702 = vdwg.mxu0
        %703 = vmatpush.msra.mxu0 0.0
        %704 = vmatpush.msra.mxu0 0.0
        %705 = vmatpush.msra.mxu0 0.0
        %706 = vmatpush.msra.mxu0 0.0
        %707 = vmatpush.msra.mxu0 0.0
        %708 = vmatpush.msra.mxu0 0.0
        %709 = vmatpush.msra.mxu0 0.0
        %710 = vmatpush.msra.mxu0 0.0
        %711 = vmatpush.msra.mxu0 %v538
        %712 = vmatpush.msra.mxu0 %v534
        %713 = vmatpush.msra.mxu0 %v530
        %714 = vmatpush.msra.mxu0 %v526
        %715 = vmatpush.msra.mxu0 %v522
        %716 = vmatpush.msra.mxu0 %v518
        %717 = vmatpush.msra.mxu0 %v514
        %718 = vmatpush.msra.mxu0 %v510
        %719 = vmatmul.f32.gmra.mxu0 %v598
        %v720 = vpop.f32.mrf.mxu0
        %v721 = vadd.f32 %v559, %v720
        %722 = vmatmul.f32.gmra.mxu0 %v601
        %v723 = vpop.f32.mrf.mxu0
        %v724 = vadd.f32 %v564, %v723
        %725 = vmatmul.f32.gmra.mxu0 %v604
        %v726 = vpop.f32.mrf.mxu0
        %v727 = vadd.f32 %v569, %v726
        %728 = vmatmul.f32.gmra.mxu0 %v607
        %v729 = vpop.f32.mrf.mxu0
        %v730 = vadd.f32 %v574, %v729
        %731 = vmatmul.f32.gmra.mxu0 %v610
        %v732 = vpop.f32.mrf.mxu0
        %v733 = vadd.f32 %v579, %v732
        %734 = vmatmul.f32.gmra.mxu0 %v613
        %v735 = vpop.f32.mrf.mxu0
        %v736 = vadd.f32 %v584, %v735
        %737 = vmatmul.f32.gmra.mxu0 %v616
        %v738 = vpop.f32.mrf.mxu0
        %v739 = vadd.f32 %v589, %v738
        %740 = vmatmul.f32.gmra.mxu0 %v619
        %v741 = vpop.f32.mrf.mxu0
        %v742 = vadd.f32 %v594, %v741
        %743 = vdwg.mxu0
        %744 = vmatpush.msra.mxu0 0.0
        %745 = vmatpush.msra.mxu0 0.0
        %746 = vmatpush.msra.mxu0 0.0
        %747 = vmatpush.msra.mxu0 0.0
        %748 = vmatpush.msra.mxu0 0.0
        %749 = vmatpush.msra.mxu0 0.0
        %750 = vmatpush.msra.mxu0 0.0
        %751 = vmatpush.msra.mxu0 0.0
        %752 = vmatpush.msra.mxu0 %v539
        %753 = vmatpush.msra.mxu0 %v535
        %754 = vmatpush.msra.mxu0 %v531
        %755 = vmatpush.msra.mxu0 %v527
        %756 = vmatpush.msra.mxu0 %v523
        %757 = vmatpush.msra.mxu0 %v519
        %758 = vmatpush.msra.mxu0 %v515
        %759 = vmatpush.msra.mxu0 %v511
        %760 = vmatmul.f32.gmra.mxu0 %v598
        %v761 = vpop.f32.mrf.mxu0
        %v762 = vadd.f32 %v559, %v761
        %763 = vmatmul.f32.gmra.mxu0 %v601
        %v764 = vpop.f32.mrf.mxu0
        %v765 = vadd.f32 %v564, %v764
        %766 = vmatmul.f32.gmra.mxu0 %v604
        %v767 = vpop.f32.mrf.mxu0
        %v768 = vadd.f32 %v569, %v767
        %769 = vmatmul.f32.gmra.mxu0 %v607
        %v770 = vpop.f32.mrf.mxu0
        %v771 = vadd.f32 %v574, %v770
        %772 = vmatmul.f32.gmra.mxu0 %v610
        %v773 = vpop.f32.mrf.mxu0
        %v774 = vadd.f32 %v579, %v773
        %775 = vmatmul.f32.gmra.mxu0 %v613
        %v776 = vpop.f32.mrf.mxu0
        %v777 = vadd.f32 %v584, %v776
        %778 = vmatmul.f32.gmra.mxu0 %v616
        %v779 = vpop.f32.mrf.mxu0
        %v780 = vadd.f32 %v589, %v779
        %781 = vmatmul.f32.gmra.mxu0 %v619
        %v782 = vpop.f32.mrf.mxu0
        %v783 = vadd.f32 %v594, %v782
        %784 = vdwg.mxu0
        %v785 = vmax.f32 %v639, 0.0
        %v786 = vmax.f32 %v680, 0.0
        %v787 = vmax.f32 %v721, 0.0
        %v788 = vmax.f32 %v762, 0.0
        %v789 = vmax.f32 %v642, 0.0
        %v790 = vmax.f32 %v683, 0.0
        %v791 = vmax.f32 %v724, 0.0
        %v792 = vmax.f32 %v765, 0.0
        %v793 = vmax.f32 %v645, 0.0
        %v794 = vmax.f32 %v686, 0.0
        %v795 = vmax.f32 %v727, 0.0
        %v796 = vmax.f32 %v768, 0.0
        %v797 = vmax.f32 %v648, 0.0
        %v798 = vmax.f32 %v689, 0.0
        %v799 = vmax.f32 %v730, 0.0
        %v800 = vmax.f32 %v771, 0.0
        %v801 = vmax.f32 %v651, 0.0
        %v802 = vmax.f32 %v692, 0.0
        %v803 = vmax.f32 %v733, 0.0
        %v804 = vmax.f32 %v774, 0.0
        %v805 = vmax.f32 %v654, 0.0
        %v806 = vmax.f32 %v695, 0.0
        %v807 = vmax.f32 %v736, 0.0
        %v808 = vmax.f32 %v777, 0.0
        %v809 = vmax.f32 %v657, 0.0
        %v810 = vmax.f32 %v698, 0.0
        %v811 = vmax.f32 %v739, 0.0
        %v812 = vmax.f32 %v780, 0.0
        %v813 = vmax.f32 %v660, 0.0
        %v814 = vmax.f32 %v701, 0.0
        %v815 = vmax.f32 %v742, 0.0
        %v816 = vmax.f32 %v783, 0.0
        %817 = vst [vmem:[%s244] sm:$0xff] %v785
        %818 = vst [vmem:[%s244 + $0x8] sm:$0xff] %v786
        %819 = vst [vmem:[%s244 + $0x10] sm:$0xff] %v787
        %820 = vst [vmem:[%s244 + $0x18] sm:$0xff] %v788
        %821 = vst [vmem:[%s244 + $0x20] sm:$0xff] %v789
        %822 = vst [vmem:[%s244 + $0x28] sm:$0xff] %v790
        %823 = vst [vmem:[%s244 + $0x30] sm:$0xff] %v791
        %824 = vst [vmem:[%s244 + $0x38] sm:$0xff] %v792
        %825 = vst [vmem:[%s244 + $0x40] sm:$0xff] %v793
        %826 = vst [vmem:[%s244 + $0x48] sm:$0xff] %v794
        %827 = vst [vmem:[%s244 + $0x50] sm:$0xff] %v795
        %828 = vst [vmem:[%s244 + $0x58] sm:$0xff] %v796
        %829 = vst [vmem:[%s244 + $0x60] sm:$0xff] %v797
        %830 = vst [vmem:[%s244 + $0x68] sm:$0xff] %v798
        %831 = vst [vmem:[%s244 + $0x70] sm:$0xff] %v799
        %832 = vst [vmem:[%s244 + $0x78] sm:$0xff] %v800
        %833 = vst [vmem:[%s244 + $0x80] sm:$0xff] %v801
        %834 = vst [vmem:[%s244 + $0x88] sm:$0xff] %v802
        %835 = vst [vmem:[%s244 + $0x90] sm:$0xff] %v803
        %836 = vst [vmem:[%s244 + $0x98] sm:$0xff] %v804
        %837 = vst [vmem:[%s244 + $0xa0] sm:$0xff] %v805
        %838 = vst [vmem:[%s244 + $0xa8] sm:$0xff] %v806
        %839 = vst [vmem:[%s244 + $0xb0] sm:$0xff] %v807
        %840 = vst [vmem:[%s244 + $0xb8] sm:$0xff] %v808
        %841 = vst [vmem:[%s244 + $0xc0] sm:$0xff] %v809
        %842 = vst [vmem:[%s244 + $0xc8] sm:$0xff] %v810
        %843 = vst [vmem:[%s244 + $0xd0] sm:$0xff] %v811
        %844 = vst [vmem:[%s244 + $0xd8] sm:$0xff] %v812
        %845 = vst [vmem:[%s244 + $0xe0] sm:$0xff] %v813
        %846 = vst [vmem:[%s244 + $0xe8] sm:$0xff] %v814
        %847 = vst [vmem:[%s244 + $0xf0] sm:$0xff] %v815
        %848 = vst [vmem:[%s244 + $0xf8] sm:$0xff] %v816
        %s849 = sand.u32 %s140, 1
        %s850 = scalar_lea.sflag [#allocation4], %s849
        %s851 = sand.u32 %s140, 1
        %s852 = smul.addr %s851, 256
        %s853 = scalar_lea.vmem [#allocation5], %s852
        // Predicated region
        $region45: #{tpu_custom_call.1} parent=39 // pred_check
          %p854 = pneg %p150
        $region46: #{tpu_custom_call.1} parent=39 // pred_check_branch
          %856 = sbr.rel (%p854) target = $region48
        $region47: #{tpu_custom_call.1} parent=39 // pred_region
          %s857 = smul.u32 4, %s22
          %859 = vsyncadd %s850, 0
          %s860 = smul.addr %s857, 8
          %s861 = scalar_lea.hbm %s5, %s860
          %s862 = sshll.u32 %s853, 4
          %s863 = int_to_ptr.vmem [resolvable:$true] %s862
          %s864 = sshll.u32 %s861, 4
          %s865 = int_to_ptr.hbm [resolvable:$true] %s864
          %870 = dma.vmem_to_hbm [thread:$0]  %s863, 4096, %s865, %s850, 512, 2048, 32
        $region48: #{tpu_custom_call.1} parent=39 // pred_fallthru
          _
      $region40: #{tpu_custom_call.1} parent=5 // pred_fallthru
        _
      %p871 = scmp.le.s32.totalorder 2, %s17
      // Predicated region
      $region49: #{tpu_custom_call.1} parent=5 // pred_check
        %p872 = pneg %p871
      $region50: #{tpu_custom_call.1} parent=5 // pred_check_branch
        %874 = sbr.rel (%p872) target = $region52
      $region51: #{tpu_custom_call.1} parent=5 // pred_region
        %s875 = ssub.s32 %s17, 2
        // Predicated region
        $region53: #{tpu_custom_call.1} parent=51 // pred_check
          %p876 = pneg %p156
        $region54: #{tpu_custom_call.1} parent=51 // pred_check_branch
          %878 = sbr.rel (%p876) target = $region56
        $region55: #{tpu_custom_call.1} parent=51 // pred_region
          %s879 = sand.u32 %s141, 1
          %s880 = scalar_lea.sflag [#allocation4], %s879
          %s881 = sand.u32 %s141, 1
          %s882 = smul.addr %s881, 256
          %s883 = scalar_lea.vmem [#allocation5], %s882
          %885 = dma.done %s880, 4096
        $region56: #{tpu_custom_call.1} parent=51 // pred_fallthru
          _
      $region52: #{tpu_custom_call.1} parent=5 // pred_fallthru
        _
    $region6: #{tpu_custom_call.1} parent=1 // loop_footer
      %s21 = sadd.s32 1, %s17
    $region7: #{tpu_custom_call.1} parent=1 // loop_footer_branch
      %16 = sbr.rel target = $region3
    $region8: #{tpu_custom_call.1} parent=1 // loop_exit
      _
    %886 = vsyncpa [#allocation3], 1
    %s887 = scalar_lea.sflag [#allocation3], 1
    %888 = vsyncpa %s887, 1
    %889 = vsyncpa [#allocation4], 1
    %s890 = scalar_lea.sflag [#allocation4], 1
    %891 = vsyncpa %s890, 1

</llo_original>
